<compile_context>
chip_gen: v5e
topology: v5e:2x2
jax: 0.10.0
libtpu: 0.0.40
codegen_flags: <defaults>
</compile_context>

<pallas_src>
import functools

import jax
import jax.numpy as jnp
from jax import lax
from jax.experimental import pallas as pl
from jax.experimental.pallas import tpu as pltpu


def _cdw_loss_kernel(w_ref, t_ref, xt_ref, out_ref, acc_ref, *,
                     power, n_cols, tile_cols, tiles_per_split, num_classes):
    p = pl.program_id(0)          # megacore split (v7x); serial no-op otherwise
    i = pl.program_id(1)          # reduction step within this split

    @pl.when(i == 0)
    def _init():
        acc_ref[...] = jnp.zeros_like(acc_ref)

    tile_idx = p * tiles_per_split + i          # logical (unclamped) tile id
    col0 = tile_idx * tile_cols
    valid = n_cols - col0                       # real batch columns in tile

    # Skip softmax/log entirely for the clamped duplicate tile that appears
    # when num_tiles is odd under the 2-way split (valid <= 0).
    @pl.when(valid > 0)
    def _compute():
        x = xt_ref[...].astype(jnp.float32)     # (C, TN) logits^T
        t = t_ref[...]                          # (1, TN) int32 targets

        # --- softmax over the class (sublane) axis, divide-free ------------
        m = jnp.max(x, axis=0, keepdims=True)   # (1, TN)
        e = jnp.exp(x - m)
        s = jnp.sum(e, axis=0, keepdims=True)
        inv = pl.reciprocal(s, approx=False)    # one reciprocal per sample
        rev = jnp.maximum(1.0 - e * inv, 1e-4)  # clamped reverse probs
        logloss = -jnp.log(rev)                 # (C, TN)

        # --- |k - target|^power weights -------------------------------------
        cls = lax.broadcasted_iota(jnp.int32, (num_classes, 1), 0)  # (C, 1)
        if power == 2.0:
            d = (cls - t).astype(jnp.float32)
            w = d * d                                          # VPU only
        elif power == 1.0:
            w = jnp.abs(cls - t).astype(jnp.float32)
        elif float(power).is_integer():
            w = lax.integer_pow(jnp.abs(cls - t).astype(jnp.float32),
                                int(power))
        else:
            # generic power: gather rows of the precomputed (C, C) table with
            # a one-hot matmul on the otherwise-idle MXU (no per-element
            # exp/log for the weights).
            onehot = jnp.where(cls == t, 1.0, 0.0)             # (C, TN)
            w = jnp.dot(w_ref[...], onehot,
                        preferred_element_type=jnp.float32)    # (C, TN)

        loss = logloss * w                                     # (C, TN)

        @pl.when(valid >= tile_cols)
        def _full_tile():
            acc_ref[...] += jnp.sum(loss, axis=0, keepdims=True)

        @pl.when(valid < tile_cols)
        def _partial_tile():
            # Mask padded lanes with a select on the final loss (NaN-safe:
            # garbage logits/targets in the padding never reach the sum).
            lane = lax.broadcasted_iota(jnp.int32, (1, tile_cols), 1)
            loss_m = jnp.where(lane < valid, loss, 0.0)
            acc_ref[...] += jnp.sum(loss_m, axis=0, keepdims=True)

    @pl.when(i == tiles_per_split - 1)
    def _finalize():
        total = jnp.sum(acc_ref[...])           # single cross-lane reduce
        out_ref[...] = jnp.broadcast_to(total, out_ref.shape)


def _tpu_tuning():
    """(num_splits, f32-working-array byte target per tile, vmem limit)."""
    try:
        kind = jax.devices()[0].device_kind.lower()
    except Exception:
        kind = ""
    is_v7 = ("v7" in kind) or ("7x" in kind)
    num_splits = 2 if is_v7 else 1              # 2 TCs only on v7x
    work_bytes = (1 << 20) if is_v7 else (2 << 20)
    vmem_limit = (32 << 20) if is_v7 else (64 << 20)
    return num_splits, work_bytes, vmem_limit


def class_distance_weighted_loss(logits, target, power=2.0, reduction="mean",
                                 block_n=None, num_splits=None):
    """logits: (N, C) float array; target: (N,) integer class indices."""
    if reduction not in ("mean", "sum"):
        raise ValueError("Undefined reduction type: " + reduction)

    n, c = logits.shape
    power = float(power)

    auto_splits, work_bytes, vmem_limit = _tpu_tuning()
    if num_splits is None:
        num_splits = auto_splits

    # Batch on the lane axis; original dtype is kept on the HBM->VMEM path.
    xt = jnp.transpose(logits)                          # (C, N)
    t = target.astype(jnp.int32).reshape(1, n)          # dense lane-major row
    k = jnp.arange(c, dtype=jnp.float32)
    w_tbl = jnp.abs(k[None, :] - k[:, None]) ** power   # (C, C); used only by
                                                        # the non-integer path

    # Tile = batch columns per grid step, sized against the ~5 live (C, TN)
    # f32 intermediates (not the input block); multiple of 128 lanes so the
    # (1, TN) target block satisfies the (8, 128) constraint.
    if block_n is None:
        bn = work_bytes // max(1, 4 * c)
        bn = max(128, min(4096, (bn // 128) * 128))
    else:
        bn = max(128, (int(block_n) // 128) * 128)
    tn = n if n <= bn else bn                            # tn % 128 == 0 or == n
    num_tiles = pl.cdiv(n, tn)
    tiles_per_split = pl.cdiv(num_tiles, num_splits)

    # Clamp the block index so DMAs never go out of bounds; the in-kernel
    # `valid` check (from the unclamped logical tile id) skips duplicates.
    def col_block(p_, i_):
        return (0, jnp.minimum(p_ * tiles_per_split + i_, num_tiles - 1))

    kernel = functools.partial(
        _cdw_loss_kernel, power=power, n_cols=n, tile_cols=tn,
        tiles_per_split=tiles_per_split, num_classes=c)

    out = pl.pallas_call(
        kernel,
        # one (8, 128) partial-sum slab per split; wrapper adds them
        out_shape=jax.ShapeDtypeStruct((num_splits * 8, 128), jnp.float32),
        grid_spec=pltpu.PrefetchScalarGridSpec(
            num_scalar_prefetch=0,
            grid=(num_splits, tiles_per_split),
            in_specs=[
                pl.BlockSpec((c, c), lambda p_, i_: (0, 0)),   # weight table
                pl.BlockSpec((1, tn), col_block),              # targets (1, N)
                pl.BlockSpec((c, tn), col_block),              # logits^T
            ],
            out_specs=pl.BlockSpec((8, 128), lambda p_, i_: (p_, 0)),
            scratch_shapes=[pltpu.VMEM((1, tn), jnp.float32)],
        ),
        compiler_params=pltpu.CompilerParams(
            dimension_semantics=("parallel", "arbitrary"),
            vmem_limit_bytes=vmem_limit,
        ),
    )(w_tbl, t, xt)

    total = jnp.sum(out[::8, 0])                # one scalar per split
    if reduction == "mean":
        return total / jnp.float32(n)
    return total


def _reference_loss(logits, target, power=2.0, reduction="mean"):
    x = logits.astype(jnp.float32)
    sm = jax.nn.softmax(x, axis=1)
    k = jnp.arange(x.shape[1], dtype=jnp.float32)[None, :]
    w = jnp.abs(k - target.astype(jnp.float32)[:, None]) ** float(power)
    rev = jnp.maximum(1.0 - sm, 1e-4)
    loss_sum = jnp.sum(-jnp.log(rev) * w, axis=1)
    return jnp.mean(loss_sum) if reduction == "mean" else jnp.sum(loss_sum)


if __name__ == "__main__":
    key = jax.random.PRNGKey(0)
    k1, k2, k3 = jax.random.split(key, 3)

    # Small class count (typical for this ordinal loss); N spans multiple
    # 128-wide tiles when block_n=128 is forced (exercises partial-tile
    # masking and, with num_splits=2, the skipped clamped-duplicate tile).
    N, C = 300, 16
    logits = jax.random.normal(k1, (N, C), dtype=jnp.float32)
    target = jax.random.randint(k2, (N,), 0, C, dtype=jnp.int32)

    for red in ("mean", "sum"):
        ref = _reference_loss(logits, target, power=2.0, reduction=red)
        for bn in (None, 128):
            for ns in (1, 2):
                out = jax.block_until_ready(class_distance_weighted_loss(
                    logits, target, power=2.0, reduction=red,
                    block_n=bn, num_splits=ns))
                assert jnp.allclose(out, ref, rtol=1e-4, atol=1e-3), \
                    (red, bn, ns, out, ref)

    # generic (non-integer) power path: weight table + one-hot MXU matmul
    ref_g = _reference_loss(logits, target, power=1.5, reduction="mean")
    out_g = jax.block_until_ready(class_distance_weighted_loss(
        logits, target, power=1.5, reduction="mean", block_n=128, num_splits=1))
    assert jnp.allclose(out_g, ref_g, rtol=1e-4, atol=1e-3), (out_g, ref_g)

    # tiny batch (single full-array tile, N not a multiple of 8), bf16 logits
    N2 = 20
    logits2 = jax.random.normal(k3, (N2, C), dtype=jnp.bfloat16)
    target2 = jax.random.randint(k2, (N2,), 0, C, dtype=jnp.int32)
    ref2 = _reference_loss(logits2, target2, power=2.0, reduction="mean")
    out2 = jax.block_until_ready(class_distance_weighted_loss(
        logits2, target2, power=2.0, reduction="mean"))
    assert jnp.allclose(out2, ref2, rtol=1e-3, atol=1e-3), (out2, ref2)

    print("KERNEL_OK")
</pallas_src>

<mosaic_0001>
module attributes {stable_mosaic.version = 11 : i64} {
  func.func @_cdw_loss_kernel(%arg0: i32, %arg1: i32, %arg2: memref<16x16xf32, #tpu.memory_space<vmem>>, %arg3: memref<1x300xi32, #tpu.memory_space<vmem>>, %arg4: memref<16x300xf32, #tpu.memory_space<vmem>>, %arg5: memref<8x128xf32, #tpu.memory_space<vmem>>, %arg6: memref<1x300xf32, #tpu.memory_space<vmem>>) attributes {dimension_semantics = [#tpu.dimension_semantics<parallel>, #tpu.dimension_semantics<arbitrary>], iteration_bounds = array<i64: 1, 1>, scalar_prefetch = 0 : i64, scratch_operands = 1 : i64, tpu.core_type = #tpu.core_type<tc>, window_params = [{pipeline_mode = #tpu.pipeline_mode<synchronous>, transform_indices = @transform_0, window_bounds = array<i64: 16, 16>}, {transform_indices = @transform_1, window_bounds = array<i64: 1, 300>}, {transform_indices = @transform_2, window_bounds = array<i64: 16, 300>}, {transform_indices = @transform_3, window_bounds = array<i64: 8, 128>}]} {
    %c0_i32 = arith.constant 0 : i32
    %0 = arith.cmpi eq, %arg1, %c0_i32 : i32
    %1 = arith.extui %0 : i1 to i32
    %c0_i32_0 = arith.constant 0 : i32
    %2 = arith.cmpi ne, %1, %c0_i32_0 : i32
    scf.if %2 {
      %cst = arith.constant 0.000000e+00 : f32
      %13 = vector.broadcast %cst : f32 to vector<1x300xf32>
      %c0 = arith.constant 0 : index
      %c0_6 = arith.constant 0 : index
      %14 = vector.load %arg6[%c0, %c0_6] : memref<1x300xf32, #tpu.memory_space<vmem>>, vector<1x300xf32>
      tpu.vector_store %arg6[%c0, %c0_6], %13 {strides = array<i32>} : memref<1x300xf32, #tpu.memory_space<vmem>>, vector<1x300xf32>,
    } else {
    }
    %c1_i32 = arith.constant 1 : i32
    %3 = arith.muli %arg0, %c1_i32 : i32
    %4 = arith.addi %3, %arg1 : i32
    %c300_i32 = arith.constant 300 : i32
    %5 = arith.muli %4, %c300_i32 : i32
    %c300_i32_1 = arith.constant 300 : i32
    %6 = arith.subi %c300_i32_1, %5 : i32
    %c0_i32_2 = arith.constant 0 : i32
    %7 = arith.cmpi sgt, %6, %c0_i32_2 : i32
    %8 = arith.extui %7 : i1 to i32
    %c0_i32_3 = arith.constant 0 : i32
    %9 = arith.cmpi ne, %8, %c0_i32_3 : i32
    scf.if %9 {
      %c0 = arith.constant 0 : index
      %c0_6 = arith.constant 0 : index
      %13 = vector.load %arg4[%c0, %c0_6] : memref<16x300xf32, #tpu.memory_space<vmem>>, vector<16x300xf32>
      %c0_7 = arith.constant 0 : index
      %c0_8 = arith.constant 0 : index
      %14 = vector.load %arg3[%c0_7, %c0_8] : memref<1x300xi32, #tpu.memory_space<vmem>>, vector<1x300xi32>
      %cst = arith.constant dense<0xFF800000> : vector<300xf32>
      %15 = vector.multi_reduction <maximumf>, %13, %cst [0] : vector<16x300xf32> to vector<300xf32>
      %16 = vector.shape_cast %15 : vector<300xf32> to vector<1x300xf32>
      %17 = vector.broadcast %16 : vector<1x300xf32> to vector<16x300xf32>
      %18 = arith.subf %13, %17 : vector<16x300xf32>
      %19 = math.exp %18 : vector<16x300xf32>
      %cst_9 = arith.constant dense<0.000000e+00> : vector<300xf32>
      %20 = vector.multi_reduction <add>, %19, %cst_9 [0] : vector<16x300xf32> to vector<300xf32>
      %21 = vector.shape_cast %20 : vector<300xf32> to vector<1x300xf32>
      %22 = tpu.reciprocal %21 : vector<1x300xf32> -> vector<1x300xf32>
      %23 = vector.broadcast %22 : vector<1x300xf32> to vector<16x300xf32>
      %24 = arith.mulf %19, %23 : vector<16x300xf32>
      %cst_10 = arith.constant 1.000000e+00 : f32
      %25 = vector.broadcast %cst_10 : f32 to vector<16x300xf32>
      %26 = arith.subf %25, %24 : vector<16x300xf32>
      %cst_11 = arith.constant 9.99999974E-5 : f32
      %27 = vector.broadcast %cst_11 : f32 to vector<16x300xf32>
      %28 = arith.maximumf %26, %27 : vector<16x300xf32>
      %29 = math.log %28 : vector<16x300xf32>
      %cst_12 = arith.constant 0.000000e+00 : f32
      %30 = vector.broadcast %cst_12 : f32 to vector<16x300xf32>
      %31 = arith.subf %30, %29 : vector<16x300xf32>
      %32 = tpu.iota {dimensions = array<i32: 0>} : vector<16x1xi32>
      %33 = vector.broadcast %32 : vector<16x1xi32> to vector<16x300xi32>
      %34 = vector.broadcast %14 : vector<1x300xi32> to vector<16x300xi32>
      %35 = arith.subi %33, %34 : vector<16x300xi32>
      %36 = arith.sitofp %35 : vector<16x300xi32> to vector<16x300xf32>
      %37 = arith.mulf %36, %36 : vector<16x300xf32>
      %38 = arith.mulf %31, %37 : vector<16x300xf32>
      %c300_i32_13 = arith.constant 300 : i32
      %39 = arith.cmpi sge, %6, %c300_i32_13 : i32
      %40 = arith.extui %39 : i1 to i32
      %c0_i32_14 = arith.constant 0 : i32
      %41 = arith.cmpi ne, %40, %c0_i32_14 : i32
      scf.if %41 {
        %c0_17 = arith.constant 0 : index
        %c0_18 = arith.constant 0 : index
        %45 = vector.load %arg6[%c0_17, %c0_18] : memref<1x300xf32, #tpu.memory_space<vmem>>, vector<1x300xf32>
        %cst_19 = arith.constant dense<0.000000e+00> : vector<300xf32>
        %46 = vector.multi_reduction <add>, %38, %cst_19 [0] : vector<16x300xf32> to vector<300xf32>
        %47 = vector.shape_cast %46 : vector<300xf32> to vector<1x300xf32>
        %48 = arith.addf %45, %47 : vector<1x300xf32>
        %c0_20 = arith.constant 0 : index
        %c0_21 = arith.constant 0 : index
        %49 = vector.load %arg6[%c0_20, %c0_21] : memref<1x300xf32, #tpu.memory_space<vmem>>, vector<1x300xf32>
        tpu.vector_store %arg6[%c0_20, %c0_21], %48 {strides = array<i32>} : memref<1x300xf32, #tpu.memory_space<vmem>>, vector<1x300xf32>,
      } else {
      }
      %c300_i32_15 = arith.constant 300 : i32
      %42 = arith.cmpi slt, %6, %c300_i32_15 : i32
      %43 = arith.extui %42 : i1 to i32
      %c0_i32_16 = arith.constant 0 : i32
      %44 = arith.cmpi ne, %43, %c0_i32_16 : i32
      scf.if %44 {
        %45 = tpu.iota {dimensions = array<i32: 1>} : vector<1x300xi32>
        %46 = vector.broadcast %6 : i32 to vector<1x300xi32>
        %47 = arith.cmpi slt, %45, %46 : vector<1x300xi32>
        %cst_17 = arith.constant 0.000000e+00 : f32
        %48 = vector.shape_cast %47 : vector<1x300xi1> to vector<1x300xi1>
        %49 = vector.broadcast %48 : vector<1x300xi1> to vector<16x300xi1>
        %50 = vector.broadcast %cst_17 : f32 to vector<16x300xf32>
        %51 = arith.select %49, %38, %50 : vector<16x300xi1>, vector<16x300xf32>
        %c0_18 = arith.constant 0 : index
        %c0_19 = arith.constant 0 : index
        %52 = vector.load %arg6[%c0_18, %c0_19] : memref<1x300xf32, #tpu.memory_space<vmem>>, vector<1x300xf32>
        %cst_20 = arith.constant dense<0.000000e+00> : vector<300xf32>
        %53 = vector.multi_reduction <add>, %51, %cst_20 [0] : vector<16x300xf32> to vector<300xf32>
        %54 = vector.shape_cast %53 : vector<300xf32> to vector<1x300xf32>
        %55 = arith.addf %52, %54 : vector<1x300xf32>
        %c0_21 = arith.constant 0 : index
        %c0_22 = arith.constant 0 : index
        %56 = vector.load %arg6[%c0_21, %c0_22] : memref<1x300xf32, #tpu.memory_space<vmem>>, vector<1x300xf32>
        tpu.vector_store %arg6[%c0_21, %c0_22], %55 {strides = array<i32>} : memref<1x300xf32, #tpu.memory_space<vmem>>, vector<1x300xf32>,
      } else {
      }
    } else {
    }
    %c0_i32_4 = arith.constant 0 : i32
    %10 = arith.cmpi eq, %arg1, %c0_i32_4 : i32
    %11 = arith.extui %10 : i1 to i32
    %c0_i32_5 = arith.constant 0 : i32
    %12 = arith.cmpi ne, %11, %c0_i32_5 : i32
    scf.if %12 {
      %c0 = arith.constant 0 : index
      %c0_6 = arith.constant 0 : index
      %13 = vector.load %arg6[%c0, %c0_6] : memref<1x300xf32, #tpu.memory_space<vmem>>, vector<1x300xf32>
      %14 = vector.shape_cast %13 : vector<1x300xf32> to vector<1x1x300xf32>
      %cst = arith.constant dense<0.000000e+00> : vector<1xf32>
      %15 = vector.multi_reduction <add>, %14, %cst [1, 2] : vector<1x1x300xf32> to vector<1xf32>
      %16 = vector.shape_cast %15 : vector<1xf32> to vector<1x1x1xf32>
      %17 = vector.extract %16[0, 0, 0] : f32 from vector<1x1x1xf32>
      %18 = vector.broadcast %17 : f32 to vector<8x128xf32>
      %c0_7 = arith.constant 0 : index
      %c0_8 = arith.constant 0 : index
      %19 = vector.load %arg5[%c0_7, %c0_8] : memref<8x128xf32, #tpu.memory_space<vmem>>, vector<8x128xf32>
      tpu.vector_store %arg5[%c0_7, %c0_8], %18 {strides = array<i32>} : memref<8x128xf32, #tpu.memory_space<vmem>>, vector<8x128xf32>,
    } else {
    }
    return
  }
  func.func @transform_0(%arg0: i32, %arg1: i32) -> (i32, i32) {
    %c0_i32 = arith.constant 0 : i32
    %c0_i32_0 = arith.constant 0 : i32
    %c0_i32_1 = arith.constant 0 : i32
    return %c0_i32, %c0_i32_0 : i32, i32
  }
  func.func @transform_1(%arg0: i32, %arg1: i32) -> (i32, i32) {
    %c1_i32 = arith.constant 1 : i32
    %0 = arith.muli %arg0, %c1_i32 : i32
    %1 = arith.addi %0, %arg1 : i32
    %c0_i32 = arith.constant 0 : i32
    %2 = arith.minsi %1, %c0_i32 : i32
    %c0_i32_0 = arith.constant 0 : i32
    %c0_i32_1 = arith.constant 0 : i32
    return %c0_i32_0, %2 : i32, i32
  }
  func.func @transform_2(%arg0: i32, %arg1: i32) -> (i32, i32) {
    %c1_i32 = arith.constant 1 : i32
    %0 = arith.muli %arg0, %c1_i32 : i32
    %1 = arith.addi %0, %arg1 : i32
    %c0_i32 = arith.constant 0 : i32
    %2 = arith.minsi %1, %c0_i32 : i32
    %c0_i32_0 = arith.constant 0 : i32
    %c0_i32_1 = arith.constant 0 : i32
    return %c0_i32_0, %2 : i32, i32
  }
  func.func @transform_3(%arg0: i32, %arg1: i32) -> (i32, i32) {
    %c0_i32 = arith.constant 0 : i32
    %c0_i32_0 = arith.constant 0 : i32
    return %arg0, %c0_i32 : i32, i32
  }
}

</mosaic_0001>

<llo_original>
// kernel: tpu_custom_call.1
$region0: #{tpu_custom_call.1}
  #allocation0 [shape = 'u32[]', space=smem, size = 0x4, offset = 0x4, fixed_abs, tag = 'smem constant byte address 0x4 - core index']
  #allocation1 [shape = 'u32[72,128]{1,0:T(1,128)}', space=vmem, size = 0x9000, scoped, tag = 'internal scratch']
  #allocation2 [shape = 'f32[1,300]{1,0:T(1,128)}', space=vmem, size = 0x600, scoped, tag = 'scratch operand']
  %s0 = inlined_call_operand.hbm [shape: f32[16,16], index: 0, kind: input, shape index: {}]
  %s1 = inlined_call_operand.hbm [shape: s32[1,300], index: 1, kind: input, shape index: {}]
  %s2 = inlined_call_operand.hbm [shape: f32[16,300], index: 2, kind: input, shape index: {}]
  %s3 = inlined_call_operand.hbm [shape: f32[8,128], index: 3, kind: output, shape index: {}]
  %s4 = sld [smem:[#allocation0]]
  $region54: #{tpu_custom_call.1} parent=0
    _
  %s6 = ssub.s32 1, %s4
  %s7 = scalar_select 0, %s6, %s4
  $region1: #{tpu_custom_call.1} parent=0
    #allocation3 [shape = 'u8[8192]{0}', space=vmem, size = 0x2000, scoped, tag = 'input window, operand 0, single buffered']
    #allocation4 [shape = 's32[1]{0}', space=sflag, size = 0x4, scoped, tag = 'scoped memory for tpu_custom_call.1']
    #allocation5 [shape = 's32[1]{0}', space=sflag, size = 0x4, scoped, tag = 'scoped memory for tpu_custom_call.1']
    #allocation6 [shape = 'u8[1536]{0}', space=vmem, size = 0x800, scoped, tag = 'input window, operand 1, single buffered']
    #allocation7 [shape = 's32[1]{0}', space=sflag, size = 0x4, scoped, tag = 'scoped memory for tpu_custom_call.1']
    #allocation8 [shape = 'u8[24576]{0}', space=vmem, size = 0x6000, scoped, tag = 'input window, operand 2, single buffered']
    #allocation9 [shape = 'u8[4096]{0}', space=vmem, size = 0x1000, scoped, tag = 'output window, operand 0, single buffered']
    %8 = vsyncpa [#allocation4], 0
    %9 = vsyncpa [#allocation7], 0
    %10 = vsyncpa [#allocation5], 0
    // Predicated region
    $region2: #{tpu_custom_call.1} parent=1 // pred_check
      _
    $region3: #{tpu_custom_call.1} parent=1 // pred_check_branch
      %12 = sbr.rel (0) target = $region5
    $region4: #{tpu_custom_call.1} parent=1 // pred_region
      %14 = vsyncadd [#allocation4], 0
      %s15 = sshll.u32 %s0, 4
      %s16 = int_to_ptr.hbm [resolvable:$true] %s15
      %s17 = sshll.u32 [#allocation3], 4
      %s18 = int_to_ptr.vmem [resolvable:$true] %s17
      %23 = dma.hbm_to_vmem [thread:$0]  %s16, 256, %s18, [#allocation4], 128, 128, 8
    $region5: #{tpu_custom_call.1} parent=1 // pred_fallthru
      _
    // Predicated region
    $region6: #{tpu_custom_call.1} parent=1 // pred_check
      _
    $region7: #{tpu_custom_call.1} parent=1 // pred_check_branch
      %25 = sbr.rel (0) target = $region9
    $region8: #{tpu_custom_call.1} parent=1 // pred_region
      %s26 = sadd.s32 0, 0
      %p27 = scmp.lt.s32.totalorder %s26, 0
      %s28 = scalar_select %p27, %s26, 0
      %s29 = smul.u32 3, %s28
      %31 = vsyncadd [#allocation7], 0
      %s32 = scalar_lea.hbm %s1, %s29
      %s34 = sshll.u32 %s32, 4
      %s35 = int_to_ptr.hbm [resolvable:$true] %s34
      %s36 = sshll.u32 [#allocation6], 4
      %s37 = int_to_ptr.vmem [resolvable:$true] %s36
      %39 = dma.hbm_to_vmem [thread:$0]  %s35, 48, %s37, [#allocation7]
    $region9: #{tpu_custom_call.1} parent=1 // pred_fallthru
      _
    // Predicated region
    $region10: #{tpu_custom_call.1} parent=1 // pred_check
      _
    $region11: #{tpu_custom_call.1} parent=1 // pred_check_branch
      %41 = sbr.rel (0) target = $region13
    $region12: #{tpu_custom_call.1} parent=1 // pred_region
      %s42 = sadd.s32 0, 0
      %p43 = scmp.lt.s32.totalorder %s42, 0
      %s44 = scalar_select %p43, %s42, 0
      %s45 = smul.u32 3, %s44
      %47 = vsyncadd [#allocation7], 0
      %s48 = smul.addr %s45, 8
      %s49 = scalar_lea.hbm %s2, %s48
      %s50 = sshll.u32 %s49, 4
      %s51 = int_to_ptr.hbm [resolvable:$true] %s50
      %s52 = sshll.u32 [#allocation8], 4
      %s53 = int_to_ptr.vmem [resolvable:$true] %s52
      %58 = dma.hbm_to_vmem [thread:$0]  %s51, 768, %s53, [#allocation7], 384, 384, 24
    $region13: #{tpu_custom_call.1} parent=1 // pred_fallthru
      _
    // Predicated region
    $region14: #{tpu_custom_call.1} parent=1 // pred_check
      _
    $region15: #{tpu_custom_call.1} parent=1 // pred_check_branch
      %60 = sbr.rel (0) target = $region17
    $region16: #{tpu_custom_call.1} parent=1 // pred_region
      %62 = dma.done [#allocation4], 256
    $region17: #{tpu_custom_call.1} parent=1 // pred_fallthru
      _
    // Predicated region
    $region18: #{tpu_custom_call.1} parent=1 // pred_check
      _
    $region19: #{tpu_custom_call.1} parent=1 // pred_check_branch
      %64 = sbr.rel (0) target = $region21
    $region20: #{tpu_custom_call.1} parent=1 // pred_region
      %66 = dma.done [#allocation7], 48
    $region21: #{tpu_custom_call.1} parent=1 // pred_fallthru
      _
    // Predicated region
    $region22: #{tpu_custom_call.1} parent=1 // pred_check
      _
    $region23: #{tpu_custom_call.1} parent=1 // pred_check_branch
      %68 = sbr.rel (0) target = $region25
    $region24: #{tpu_custom_call.1} parent=1 // pred_region
      %70 = dma.done [#allocation7], 768
    $region25: #{tpu_custom_call.1} parent=1 // pred_fallthru
      _
    %s71 = sadd.s32 0, 0
    %p72 = scmp.lt.s32.totalorder %s71, 0
    %s73 = scalar_select %p72, %s71, 0
    %s74 = smul.u32 3, %s73
    %s75 = sadd.s32 0, 0
    %p76 = scmp.lt.s32.totalorder %s75, 0
    %s77 = scalar_select %p76, %s75, 0
    %s78 = smul.u32 3, %s77
    %p79 = scmp.eq.s32.totalorder 0, 0
    // Predicated region
    $region26: #{tpu_custom_call.1} parent=1 // pred_check
      %p80 = pneg %p79
    $region27: #{tpu_custom_call.1} parent=1 // pred_check_branch
      %82 = sbr.rel (%p80) target = $region29
    $region28: #{tpu_custom_call.1} parent=1 // pred_region
      %v83 = vlaneseq
      %vm84 = vcmp.ge.s32.totalorder %v83, 0
      %vm85 = vcmp.lt.s32.totalorder %v83, 300
      %vm86 = vmand %vm84, %vm85
      %87 = vst.msk [vmem:[#allocation2] sm:$0x7] %vm86, 0.0
    $region29: #{tpu_custom_call.1} parent=1 // pred_fallthru
      _
    %s88 = sadd.s32 0, 0
    %s89 = smul.u32 %s88, 300
    %s90 = ssub.s32 300, %s89
    %p91 = scmp.gt.s32.totalorder %s90, 0
    // Predicated region
    $region30: #{tpu_custom_call.1} parent=1 // pred_check
      %p92 = pneg %p91
    $region31: #{tpu_custom_call.1} parent=1 // pred_check_branch
      %94 = sbr.rel (%p92) target = $region33
    $region32: #{tpu_custom_call.1} parent=1 // pred_region
      %v95 = vld [vmem:[#allocation8] sm:$0xff]
      %v96 = vld [vmem:[#allocation8 + $0x8] sm:$0xff]
      %v97 = vld [vmem:[#allocation8 + $0x10] sm:$0xff]
      %v98 = vld [vmem:[#allocation8 + $0x18] sm:$0xff]
      %v99 = vld [vmem:[#allocation8 + $0x20] sm:$0xff]
      %v100 = vld [vmem:[#allocation8 + $0x28] sm:$0xff]
      %v101 = vld [vmem:[#allocation6] sm:$0x7]
      %v102 = vmax.f32 %v95, %v98
      %v103 = vrot.slane %v102, 4
      %v104 = vmax.f32 %v102, %v103
      %v105 = vrot.slane %v104, 2
      %v106 = vmax.f32 %v104, %v105
      %v107 = vrot.slane %v106, 1
      %v108 = vmax.f32 %v106, %v107
      %v109 = vmax.f32 %v96, %v99
      %v110 = vrot.slane %v109, 4
      %v111 = vmax.f32 %v109, %v110
      %v112 = vrot.slane %v111, 2
      %v113 = vmax.f32 %v111, %v112
      %v114 = vrot.slane %v113, 1
      %v115 = vmax.f32 %v113, %v114
      %vm116 = vcmask 359424
      %v117 = vsel %vm116, %v97, -inf
      %v118 = vsel %vm116, %v100, -inf
      %v119 = vmax.f32 %v117, %v118
      %v120 = vrot.slane %v119, 4
      %v121 = vmax.f32 %v119, %v120
      %v122 = vrot.slane %v121, 2
      %v123 = vmax.f32 %v121, %v122
      %v124 = vrot.slane %v123, 1
      %v125 = vmax.f32 %v123, %v124
      %v126 = vsub.f32 %v95, %v108
      %v127 = vsub.f32 %v96, %v115
      %v128 = vsub.f32 %v97, %v125
      %v129 = vsub.f32 %v98, %v108
      %v130 = vsub.f32 %v99, %v115
      %v131 = vsub.f32 %v100, %v125
      %v132 = vmul.f32 %v126, 1.442695
      %v133 = vpow.pop %v132
      %v134 = vmul.f32 %v127, 1.442695
      %v135 = vpow.pop %v134
      %v136 = vmul.f32 %v128, 1.442695
      %v137 = vpow.pop %v136
      %v138 = vmul.f32 %v129, 1.442695
      %v139 = vpow.pop %v138
      %v140 = vmul.f32 %v130, 1.442695
      %v141 = vpow.pop %v140
      %v142 = vmul.f32 %v131, 1.442695
      %v143 = vpow.pop %v142
      %v144 = vadd.f32 %v133, %v139
      %v145 = vrot.slane %v144, 4
      %v146 = vadd.f32 %v144, %v145
      %v147 = vrot.slane %v146, 2
      %v148 = vadd.f32 %v146, %v147
      %v149 = vrot.slane %v148, 1
      %v150 = vadd.f32 %v148, %v149
      %v151 = vadd.f32 %v135, %v141
      %v152 = vrot.slane %v151, 4
      %v153 = vadd.f32 %v151, %v152
      %v154 = vrot.slane %v153, 2
      %v155 = vadd.f32 %v153, %v154
      %v156 = vrot.slane %v155, 1
      %v157 = vadd.f32 %v155, %v156
      %v158 = vsel %vm116, %v137, 0.0
      %v159 = vsel %vm116, %v143, 0.0
      %v160 = vadd.f32 %v158, %v159
      %v161 = vrot.slane %v160, 4
      %v162 = vadd.f32 %v160, %v161
      %v163 = vrot.slane %v162, 2
      %v164 = vadd.f32 %v162, %v163
      %v165 = vrot.slane %v164, 1
      %v166 = vadd.f32 %v164, %v165
      %v167 = vrcp.pop %v150
      %v168 = vmul.f32 %v150, %v167
      %v169 = vsub.f32 1.0, %v168
      %v170 = vmul.f32 %v167, %v169
      %v171 = vadd.f32 %v167, %v170
      %vm172 = vweird.f32 %v150
      %vm173 = vweird.f32 %v167
      %vm174 = vmor %vm172, %vm173
      %v175 = vsel %vm174, %v167, %v171
      %v176 = vand.u32 2147483647, %v150
      %vm177 = vcmp.eq.f32.partialorder %v176, 8.507059e+37
      %v178 = vand.u32 %v150, 2147483648
      %v179 = vor.u32 1.1754944e-38, %v178
      %v180 = vsel %vm177, %v179, %v175
      %v181 = vrcp.pop %v157
      %v182 = vmul.f32 %v157, %v181
      %v183 = vsub.f32 1.0, %v182
      %v184 = vmul.f32 %v181, %v183
      %v185 = vadd.f32 %v181, %v184
      %vm186 = vweird.f32 %v157
      %vm187 = vweird.f32 %v181
      %vm188 = vmor %vm186, %vm187
      %v189 = vsel %vm188, %v181, %v185
      %v190 = vand.u32 2147483647, %v157
      %vm191 = vcmp.eq.f32.partialorder %v190, 8.507059e+37
      %v192 = vand.u32 %v157, 2147483648
      %v193 = vor.u32 1.1754944e-38, %v192
      %v194 = vsel %vm191, %v193, %v189
      %v195 = vrcp.pop %v166
      %v196 = vmul.f32 %v166, %v195
      %v197 = vsub.f32 1.0, %v196
      %v198 = vmul.f32 %v195, %v197
      %v199 = vadd.f32 %v195, %v198
      %vm200 = vweird.f32 %v166
      %vm201 = vweird.f32 %v195
      %vm202 = vmor %vm200, %vm201
      %v203 = vsel %vm202, %v195, %v199
      %v204 = vand.u32 2147483647, %v166
      %vm205 = vcmp.eq.f32.partialorder %v204, 8.507059e+37
      %v206 = vand.u32 %v166, 2147483648
      %v207 = vor.u32 1.1754944e-38, %v206
      %v208 = vsel %vm205, %v207, %v203
      %v209 = vmul.f32 %v133, %v180
      %v210 = vmul.f32 %v135, %v194
      %v211 = vmul.f32 %v137, %v208
      %v212 = vmul.f32 %v139, %v180
      %v213 = vmul.f32 %v141, %v194
      %v214 = vmul.f32 %v143, %v208
      %v215 = vsub.f32 1.0, %v209
      %v216 = vsub.f32 1.0, %v210
      %v217 = vsub.f32 1.0, %v211
      %v218 = vsub.f32 1.0, %v212
      %v219 = vsub.f32 1.0, %v213
      %v220 = vsub.f32 1.0, %v214
      %v221 = vmax.f32 %v215, 0.0001
      %v222 = vmax.f32 %v216, 0.0001
      %v223 = vmax.f32 %v217, 0.0001
      %v224 = vmax.f32 %v218, 0.0001
      %v225 = vmax.f32 %v219, 0.0001
      %v226 = vmax.f32 %v220, 0.0001
      %v227 = vlog2.pop %v221
      %v228 = vmul.f32 %v227, 0.6931472
      %v229 = vlog2.pop %v222
      %v230 = vmul.f32 %v229, 0.6931472
      %v231 = vlog2.pop %v223
      %v232 = vmul.f32 %v231, 0.6931472
      %v233 = vlog2.pop %v224
      %v234 = vmul.f32 %v233, 0.6931472
      %v235 = vlog2.pop %v225
      %v236 = vmul.f32 %v235, 0.6931472
      %v237 = vlog2.pop %v226
      %v238 = vmul.f32 %v237, 0.6931472
      %v239 = vsub.f32 0.0, %v228
      %v240 = vsub.f32 0.0, %v230
      %v241 = vsub.f32 0.0, %v232
      %v242 = vsub.f32 0.0, %v234
      %v243 = vsub.f32 0.0, %v236
      %v244 = vsub.f32 0.0, %v238
      %v245 = vlaneseq
      %v246 = vshrl.u32 %v245, 7
      %v247 = vadd.s32 %v246, 8
      %v248 = vperm.slane %v101, 0
      %v249 = vperm.slane %v101, 1
      %v250 = vperm.slane %v101, 2
      %v251 = vsub.s32 %v246, %v248
      %v252 = vsub.s32 %v246, %v249
      %v253 = vsub.s32 %v246, %v250
      %v254 = vsub.s32 %v247, %v248
      %v255 = vsub.s32 %v247, %v249
      %v256 = vsub.s32 %v247, %v250
      %v257 = vcvt.s32.f32 %v251
      %v258 = vcvt.s32.f32 %v252
      %v259 = vcvt.s32.f32 %v253
      %v260 = vcvt.s32.f32 %v254
      %v261 = vcvt.s32.f32 %v255
      %v262 = vcvt.s32.f32 %v256
      %v263 = vmul.f32 %v257, %v257
      %v264 = vmul.f32 %v258, %v258
      %v265 = vmul.f32 %v259, %v259
      %v266 = vmul.f32 %v260, %v260
      %v267 = vmul.f32 %v261, %v261
      %v268 = vmul.f32 %v262, %v262
      %v269 = vmul.f32 %v239, %v263
      %v270 = vmul.f32 %v240, %v264
      %v271 = vmul.f32 %v241, %v265
      %v272 = vmul.f32 %v242, %v266
      %v273 = vmul.f32 %v243, %v267
      %v274 = vmul.f32 %v244, %v268
      %p275 = scmp.ge.s32.totalorder %s90, 300
      // Predicated region
      $region34: #{tpu_custom_call.1} parent=32 // pred_check
        %p276 = pneg %p275
      $region35: #{tpu_custom_call.1} parent=32 // pred_check_branch
        %278 = sbr.rel (%p276) target = $region37
      $region36: #{tpu_custom_call.1} parent=32 // pred_region
        %v279 = vld [vmem:[#allocation2] sm:$0x7]
        %v280 = vadd.f32 %v269, %v272
        %v281 = vrot.slane %v280, 4
        %v282 = vadd.f32 %v280, %v281
        %v283 = vrot.slane %v282, 2
        %v284 = vadd.f32 %v282, %v283
        %v285 = vrot.slane %v284, 1
        %v286 = vadd.f32 %v284, %v285
        %v287 = vadd.f32 %v270, %v273
        %v288 = vrot.slane %v287, 4
        %v289 = vadd.f32 %v287, %v288
        %v290 = vrot.slane %v289, 2
        %v291 = vadd.f32 %v289, %v290
        %v292 = vrot.slane %v291, 1
        %v293 = vadd.f32 %v291, %v292
        %v294 = vsel %vm116, %v271, 0.0
        %v295 = vsel %vm116, %v274, 0.0
        %v296 = vadd.f32 %v294, %v295
        %v297 = vrot.slane %v296, 4
        %v298 = vadd.f32 %v296, %v297
        %v299 = vrot.slane %v298, 2
        %v300 = vadd.f32 %v298, %v299
        %v301 = vrot.slane %v300, 1
        %v302 = vadd.f32 %v300, %v301
        %v306 = vrot.slane %v293, 7
        %v307 = vrot.slane %v302, 6
        %vm308 = vcmask 1040384
        %v309 = vsel %vm308, %v286, %v306
        %vm310 = vcmask 1041408
        %v311 = vsel %vm310, %v309, %v307
        %v313 = vadd.f32 %v279, %v311
        %v314 = vlaneseq
        %vm315 = vcmp.ge.s32.totalorder %v314, 0
        %vm316 = vcmp.lt.s32.totalorder %v314, 300
        %vm317 = vmand %vm315, %vm316
        %318 = vst.msk [vmem:[#allocation2] sm:$0x7] %vm317, %v313
      $region37: #{tpu_custom_call.1} parent=32 // pred_fallthru
        _
      %p319 = scmp.lt.s32.totalorder %s90, 300
      // Predicated region
      $region38: #{tpu_custom_call.1} parent=32 // pred_check
        %p320 = pneg %p319
      $region39: #{tpu_custom_call.1} parent=32 // pred_check_branch
        %322 = sbr.rel (%p320) target = $region41
      $region40: #{tpu_custom_call.1} parent=32 // pred_region
        %v323 = vlaneseq
        %v324 = vand.u32 %v323, 127
        %v325 = vadd.s32 %v324, 128
        %v326 = vadd.s32 %v324, 256
        %v327 = vstv %s90
        %vm328 = vcmp.lt.s32.totalorder %v324, %v327
        %vm329 = vcmp.lt.s32.totalorder %v325, %v327
        %vm330 = vcmp.lt.s32.totalorder %v326, %v327
        %v331 = vsel %vm328, 1, 0
        %v332 = vsel %vm329, 1, 0
        %v333 = vsel %vm330, 1, 0
        %vm334 = vcmp.eq.s32.totalorder %v331, 1
        %vm335 = vcmp.eq.s32.totalorder %v332, 1
        %vm336 = vcmp.eq.s32.totalorder %v333, 1
        %v337 = vsel %vm334, %v269, 0.0
        %v338 = vsel %vm335, %v270, 0.0
        %v339 = vsel %vm336, %v271, 0.0
        %v340 = vsel %vm334, %v272, 0.0
        %v341 = vsel %vm335, %v273, 0.0
        %v342 = vsel %vm336, %v274, 0.0
        %v343 = vld [vmem:[#allocation2] sm:$0x7]
        %v344 = vadd.f32 %v337, %v340
        %v345 = vrot.slane %v344, 4
        %v346 = vadd.f32 %v344, %v345
        %v347 = vrot.slane %v346, 2
        %v348 = vadd.f32 %v346, %v347
        %v349 = vrot.slane %v348, 1
        %v350 = vadd.f32 %v348, %v349
        %v351 = vadd.f32 %v338, %v341
        %v352 = vrot.slane %v351, 4
        %v353 = vadd.f32 %v351, %v352
        %v354 = vrot.slane %v353, 2
        %v355 = vadd.f32 %v353, %v354
        %v356 = vrot.slane %v355, 1
        %v357 = vadd.f32 %v355, %v356
        %v358 = vsel %vm116, %v339, 0.0
        %v359 = vsel %vm116, %v342, 0.0
        %v360 = vadd.f32 %v358, %v359
        %v361 = vrot.slane %v360, 4
        %v362 = vadd.f32 %v360, %v361
        %v363 = vrot.slane %v362, 2
        %v364 = vadd.f32 %v362, %v363
        %v365 = vrot.slane %v364, 1
        %v366 = vadd.f32 %v364, %v365
        %v370 = vrot.slane %v357, 7
        %v371 = vrot.slane %v366, 6
        %vm372 = vcmask 1040384
        %v373 = vsel %vm372, %v350, %v370
        %vm374 = vcmask 1041408
        %v375 = vsel %vm374, %v373, %v371
        %v377 = vadd.f32 %v343, %v375
        %v378 = vlaneseq
        %vm379 = vcmp.ge.s32.totalorder %v378, 0
        %vm380 = vcmp.lt.s32.totalorder %v378, 300
        %vm381 = vmand %vm379, %vm380
        %382 = vst.msk [vmem:[#allocation2] sm:$0x7] %vm381, %v377
      $region41: #{tpu_custom_call.1} parent=32 // pred_fallthru
        _
    $region33: #{tpu_custom_call.1} parent=1 // pred_fallthru
      _
    // Predicated region
    $region42: #{tpu_custom_call.1} parent=1 // pred_check
      %p383 = pneg %p79
    $region43: #{tpu_custom_call.1} parent=1 // pred_check_branch
      %385 = sbr.rel (%p383) target = $region45
    $region44: #{tpu_custom_call.1} parent=1 // pred_region
      %v386 = vld [vmem:[#allocation2] sm:$0x7]
      %v388 = vperm.slane %v386, 0
      %v389 = vperm.slane %v386, 1
      %v390 = vperm.slane %v386, 2
      %vm394 = vcmask 1040384
      %v395 = vsel %vm394, %v388, 0.0
      %v396 = vsel %vm394, %v389, 0.0
      %v397 = vadd.f32 %v395, %v396
      %vm398 = vcmask 352256
      %v399 = vsel %vm398, %v390, 0.0
      %v400 = vadd.f32 %v397, %v399
      %401 = vadd.xlane.f32.xlu0 %v400
      %v402 = vpop.xlane.xlu0 %401
      %v403 = vrot.slane %v402, 4
      %v404 = vadd.f32 %v402, %v403
      %v405 = vrot.slane %v404, 2
      %v406 = vadd.f32 %v404, %v405
      %v407 = vrot.slane %v406, 1
      %v408 = vadd.f32 %v406, %v407
      %s409 = vtos %v408
      %v410 = vstv %s409
      %411 = vst [vmem:[#allocation9] sm:$0xff] %v410
    $region45: #{tpu_custom_call.1} parent=1 // pred_fallthru
      _
    // Predicated region
    $region46: #{tpu_custom_call.1} parent=1 // pred_check
      _
    $region47: #{tpu_custom_call.1} parent=1 // pred_check_branch
      %413 = sbr.rel (0) target = $region49
    $region48: #{tpu_custom_call.1} parent=1 // pred_region
      %415 = vsyncadd [#allocation5], 0
      %s417 = sshll.u32 [#allocation9], 4
      %s418 = int_to_ptr.vmem [resolvable:$true] %s417
      %s419 = sshll.u32 %s3, 4
      %s420 = int_to_ptr.hbm [resolvable:$true] %s419
      %422 = dma.vmem_to_hbm [thread:$0]  %s418, 128, %s420, [#allocation5]
    $region49: #{tpu_custom_call.1} parent=1 // pred_fallthru
      _
    // Predicated region
    $region50: #{tpu_custom_call.1} parent=1 // pred_check
      _
    $region51: #{tpu_custom_call.1} parent=1 // pred_check_branch
      %424 = sbr.rel (0) target = $region53
    $region52: #{tpu_custom_call.1} parent=1 // pred_region
      %426 = dma.done [#allocation5], 128
    $region53: #{tpu_custom_call.1} parent=1 // pred_fallthru
      _
    %427 = vsyncpa [#allocation4], 1
    %428 = vsyncpa [#allocation7], 1
    %429 = vsyncpa [#allocation5], 1

</llo_original>
